<compile_context>
chip_gen: v7x
topology: tpu7x:2x2x1
jax: 0.10.0
libtpu: 0.0.40
codegen_flags: <defaults>
</compile_context>

<pallas_src>
import functools

import jax
import jax.numpy as jnp
import numpy as np
from jax.experimental import pallas as pl
from jax.experimental.pallas import tpu as pltpu

_LANE_WIDTH = 1024                      # lane-dense slab width (multiple of 128)
_TARGET_BLOCK_BYTES = 2 * 1024 * 1024   # ~2 MiB per stream per pipeline buffer
_VMEM_LIMIT_BYTES = 32 * 1024 * 1024    # 16 MiB worst-case buffers + headroom


def _row_multiple(dtype) -> int:
    """Block row counts must be multiples of the packed sublane tile height."""
    bits = jnp.dtype(dtype).itemsize * 8
    return max(8, (32 // bits) * 8)      # 8 (32-bit), 16 (16-bit), 32 (8-bit)


def _mask_kernel(target_ref, input_ref, mtgt_ref, minp_ref, *, value_mask_exclude):
    t = target_ref[...]
    x = input_ref[...]
    excl = t == value_mask_exclude
    mtgt_ref[...] = jnp.where(excl, jnp.zeros_like(t), t)
    minp_ref[...] = jnp.where(excl, jnp.zeros_like(x), x)


def _mask_jax(t, x, value_mask_exclude):
    excl = t == value_mask_exclude
    return (jnp.where(excl, jnp.zeros_like(t), t),
            jnp.where(excl, jnp.zeros_like(x), x))


def _flatten_and_mask(target, inp, *, value_mask_exclude):
    """torch.flatten + _get_masked_input applied to both tensors.

    Returns (masked_target_flat, masked_input_flat), both 1-D with the original
    element count.
    """
    t = jnp.ravel(target)
    x = jnp.ravel(inp)
    n = t.shape[0]

    row_mult = max(_row_multiple(t.dtype), _row_multiple(x.dtype))
    rows = n // _LANE_WIDTH

    # Small-input fast path: pallas_call dispatch overhead would dominate and
    # XLA fuses the elementwise mask for free.
    if rows < row_mult:
        return _mask_jax(t, x, value_mask_exclude)

    # Dtype-aware block rows targeting ~_TARGET_BLOCK_BYTES per stream per step.
    max_item = max(jnp.dtype(t.dtype).itemsize, jnp.dtype(x.dtype).itemsize)
    rows_by_bytes = max(1, _TARGET_BLOCK_BYTES // (_LANE_WIDTH * max_item))
    block_rows = min(rows, rows_by_bytes)
    block_rows = max(row_mult, (block_rows // row_mult) * row_mult)

    n_main = rows * _LANE_WIDTH
    # No-op slices/reshapes when n % 1024 == 0 (the common case); otherwise only
    # the bulk goes through the kernel and the small tail is handled below.
    t2 = t[:n_main].reshape(rows, _LANE_WIDTH)
    x2 = x[:n_main].reshape(rows, _LANE_WIDTH)

    kernel = functools.partial(_mask_kernel, value_mask_exclude=value_mask_exclude)
    block = (block_rows, _LANE_WIDTH)
    bytes_accessed = 2 * n_main * (jnp.dtype(t.dtype).itemsize
                                   + jnp.dtype(x.dtype).itemsize)

    mt2, mx2 = pl.pallas_call(
        kernel,
        grid=(pl.cdiv(rows, block_rows),),   # partial last block handled by Pallas
        in_specs=[
            pl.BlockSpec(block, lambda i: (i, 0)),
            pl.BlockSpec(block, lambda i: (i, 0)),
        ],
        out_specs=(
            pl.BlockSpec(block, lambda i: (i, 0)),
            pl.BlockSpec(block, lambda i: (i, 0)),
        ),
        out_shape=(
            jax.ShapeDtypeStruct((rows, _LANE_WIDTH), t.dtype),
            jax.ShapeDtypeStruct((rows, _LANE_WIDTH), x.dtype),
        ),
        compiler_params=pltpu.CompilerParams(
            dimension_semantics=("parallel",),
            vmem_limit_bytes=_VMEM_LIMIT_BYTES),
        cost_estimate=pl.CostEstimate(
            flops=3 * n_main, transcendentals=0, bytes_accessed=bytes_accessed),
    )(t2, x2)

    mt = mt2.reshape(-1)
    mx = mx2.reshape(-1)

    if n_main < n:   # static Python condition; tail (<1024 elems) via fused XLA ops
        tt, tx = _mask_jax(t[n_main:], x[n_main:], value_mask_exclude)
        mt = jnp.concatenate([mt, tt])
        mx = jnp.concatenate([mx, tx])
    return mt, mx


class Metric:
    """JAX/Pallas port of the PyTorch `Metric` base class."""

    def __init__(self, is_mask_exclude: bool = False) -> None:
        self._is_mask_exclude = is_mask_exclude
        self._value_mask_exclude = -1.0  # conventional MetricBase mask value

    # --- forward path -------------------------------------------------------
    def forward(self, target, inp):
        return self.compute(target, inp)

    def loss(self, target, inp):
        return self.forward(target, inp)

    def compute(self, target, inp):
        if self._is_mask_exclude:
            return self._compute_masked(jnp.ravel(target), jnp.ravel(inp))
        return self._compute(jnp.ravel(target), jnp.ravel(inp))

    def _compute_masked(self, target, inp):
        mt, mx = _flatten_and_mask(
            target, inp, value_mask_exclude=self._value_mask_exclude)
        return self._compute(mt, mx)

    # --- abstract in the reference module ------------------------------------
    def _compute(self, target, inp):
        # TODO(synk): abstract in the PyTorch base class (raises NotImplementedError).
        # Concrete subclasses should fuse their scalar reduction into the Pallas
        # kernel (VMEM accumulator + @pl.when init/finalize) so the two masked
        # arrays never round-trip through HBM.
        raise NotImplementedError

    # --- helper equivalents ---------------------------------------------------
    def _get_mask(self, target):
        return jnp.where(target == self._value_mask_exclude,
                         jnp.zeros_like(target), jnp.ones_like(target))

    def _get_masked_input(self, inp, target):
        return jnp.where(target == self._value_mask_exclude,
                         jnp.zeros_like(inp), inp)

    def get_masked_inputs(self, target, inp):
        """flatten + _get_masked_input applied to both tensors (Pallas path)."""
        return _flatten_and_mask(
            target, inp, value_mask_exclude=self._value_mask_exclude)


def _reference(target, inp, value_mask_exclude):
    t = jnp.ravel(target)
    x = jnp.ravel(inp)
    excl = t == value_mask_exclude
    return (jnp.where(excl, jnp.zeros_like(t), t),
            jnp.where(excl, jnp.zeros_like(x), x))


if __name__ == "__main__":
    key = jax.random.PRNGKey(0)
    metric = Metric(is_mask_exclude=True)

    # (name, shape, input_dtype): small XLA fast path, single-block Pallas path,
    # multi-block + partial-last-block + tail path, and a mixed-dtype path that
    # exercises the dtype-aware row tiling.
    cases = [
        ("fast_path", (2, 4, 16, 16), jnp.float32),    # 2048 elems  -> XLA fast path
        ("pallas_1blk", (2, 4, 32, 32), jnp.float32),  # 8192 elems  -> Pallas, no tail
        ("pallas_tail", (2, 4, 37, 41), jnp.float32),  # 12136 elems -> partial blk + tail
        ("pallas_bf16", (2, 4, 32, 64), jnp.bfloat16), # 16384 elems -> mixed dtypes
    ]

    for name, shape, in_dtype in cases:
        key, k_t, k_x, k_m = jax.random.split(key, 4)
        target = jax.random.uniform(k_t, shape, dtype=jnp.float32)
        inp = jax.random.uniform(k_x, shape, dtype=jnp.float32).astype(in_dtype)
        mask_pos = jax.random.bernoulli(k_m, 0.25, shape)
        target = jnp.where(mask_pos, jnp.float32(-1.0), target)

        mt, mx = metric.get_masked_inputs(target, inp)
        mt, mx = jax.block_until_ready((mt, mx))

        ref_t, ref_x = _reference(target, inp, metric._value_mask_exclude)
        n = int(np.prod(shape))
        assert mt.shape == (n,) and mx.shape == (n,), name
        assert mt.dtype == target.dtype and mx.dtype == inp.dtype, name
        np.testing.assert_array_equal(
            np.asarray(mt, dtype=np.float32), np.asarray(ref_t, dtype=np.float32),
            err_msg=name)
        np.testing.assert_array_equal(
            np.asarray(mx, dtype=np.float32), np.asarray(ref_x, dtype=np.float32),
            err_msg=name)

    print("KERNEL_OK")
</pallas_src>

<mosaic_0001>
module attributes {stable_mosaic.version = 11 : i64} {
  func.func @_mask_kernel(%arg0: i32, %arg1: memref<8x1024xf32, #tpu.memory_space<vmem>>, %arg2: memref<8x1024xf32, #tpu.memory_space<vmem>>, %arg3: memref<8x1024xf32, #tpu.memory_space<vmem>>, %arg4: memref<8x1024xf32, #tpu.memory_space<vmem>>) attributes {dimension_semantics = [#tpu.dimension_semantics<parallel>], iteration_bounds = array<i64: 1>, scalar_prefetch = 0 : i64, scratch_operands = 0 : i64, tpu.core_type = #tpu.core_type<tc>, window_params = [{transform_indices = @transform_0, window_bounds = array<i64: 8, 1024>}, {transform_indices = @transform_1, window_bounds = array<i64: 8, 1024>}, {transform_indices = @transform_2, window_bounds = array<i64: 8, 1024>}, {transform_indices = @transform_3, window_bounds = array<i64: 8, 1024>}]} {
    %c0 = arith.constant 0 : index
    %c0_0 = arith.constant 0 : index
    %0 = vector.load %arg1[%c0, %c0_0] : memref<8x1024xf32, #tpu.memory_space<vmem>>, vector<8x1024xf32>
    %c0_1 = arith.constant 0 : index
    %c0_2 = arith.constant 0 : index
    %1 = vector.load %arg2[%c0_1, %c0_2] : memref<8x1024xf32, #tpu.memory_space<vmem>>, vector<8x1024xf32>
    %cst = arith.constant -1.000000e+00 : f32
    %2 = vector.broadcast %cst : f32 to vector<8x1024xf32>
    %3 = arith.cmpf oeq, %0, %2 : vector<8x1024xf32>
    %cst_3 = arith.constant 0.000000e+00 : f32
    %4 = vector.broadcast %cst_3 : f32 to vector<8x1024xf32>
    %5 = arith.select %3, %4, %0 : vector<8x1024xi1>, vector<8x1024xf32>
    %c0_4 = arith.constant 0 : index
    %c0_5 = arith.constant 0 : index
    %6 = vector.load %arg3[%c0_4, %c0_5] : memref<8x1024xf32, #tpu.memory_space<vmem>>, vector<8x1024xf32>
    tpu.vector_store %arg3[%c0_4, %c0_5], %5 {strides = array<i32>} : memref<8x1024xf32, #tpu.memory_space<vmem>>, vector<8x1024xf32>,
    %cst_6 = arith.constant 0.000000e+00 : f32
    %7 = vector.broadcast %cst_6 : f32 to vector<8x1024xf32>
    %8 = arith.select %3, %7, %1 : vector<8x1024xi1>, vector<8x1024xf32>
    %c0_7 = arith.constant 0 : index
    %c0_8 = arith.constant 0 : index
    %9 = vector.load %arg4[%c0_7, %c0_8] : memref<8x1024xf32, #tpu.memory_space<vmem>>, vector<8x1024xf32>
    tpu.vector_store %arg4[%c0_7, %c0_8], %8 {strides = array<i32>} : memref<8x1024xf32, #tpu.memory_space<vmem>>, vector<8x1024xf32>,
    return
  }
  func.func @transform_0(%arg0: i32) -> (i32, i32) {
    %c0_i32 = arith.constant 0 : i32
    %c0_i32_0 = arith.constant 0 : i32
    return %arg0, %c0_i32 : i32, i32
  }
  func.func @transform_1(%arg0: i32) -> (i32, i32) {
    %c0_i32 = arith.constant 0 : i32
    %c0_i32_0 = arith.constant 0 : i32
    return %arg0, %c0_i32 : i32, i32
  }
  func.func @transform_2(%arg0: i32) -> (i32, i32) {
    %c0_i32 = arith.constant 0 : i32
    %c0_i32_0 = arith.constant 0 : i32
    return %arg0, %c0_i32 : i32, i32
  }
  func.func @transform_3(%arg0: i32) -> (i32, i32) {
    %c0_i32 = arith.constant 0 : i32
    %c0_i32_0 = arith.constant 0 : i32
    return %arg0, %c0_i32 : i32, i32
  }
}

</mosaic_0001>

<llo_original>
// kernel: tpu_custom_call.1
$region0: #{tpu_custom_call.1}
  #allocation0 [shape = 'u32[]', space=smem, size = 0x4, offset = 0x4, fixed_abs, tag = 'smem constant byte address 0x4 - core index']
  #allocation1 [shape = 'u32[144,128]{1,0:T(1,128)}', space=vmem, size = 0x12000, scoped, tag = 'internal scratch']
  %s0 = inlined_call_operand.hbm [shape: f32[8,1024], index: 0, kind: input, shape index: {}]
  %s1 = inlined_call_operand.hbm [shape: f32[8,1024], index: 1, kind: input, shape index: {}]
  %s2 = inlined_call_operand.hbm [shape: f32[8,1024], index: 2, kind: output, shape index: {0}]
  %s3 = inlined_call_operand.hbm [shape: f32[8,1024], index: 3, kind: output, shape index: {1}]
  %4 = xla_tuple %s2, %s3
  %s5 = sld [smem:[#allocation0]]
  $region34: #{tpu_custom_call.1} parent=0
    _
  %s7 = ssub.s32 1, %s5
  %s8 = scalar_select 0, %s7, %s5
  $region1: #{tpu_custom_call.1} parent=0
    #allocation2 [shape = 'u8[32768]{0}', space=vmem, size = 0x8000, scoped, tag = 'input window, operand 0, single buffered']
    #allocation3 [shape = 's32[1]{0}', space=sflag, size = 0x4, scoped, tag = 'scoped memory for tpu_custom_call.1']
    #allocation4 [shape = 's32[1]{0}', space=sflag, size = 0x4, scoped, tag = 'scoped memory for tpu_custom_call.1']
    #allocation5 [shape = 'u8[32768]{0}', space=vmem, size = 0x8000, scoped, tag = 'input window, operand 1, single buffered']
    #allocation6 [shape = 's32[1]{0}', space=sflag, size = 0x4, scoped, tag = 'scoped memory for tpu_custom_call.1']
    #allocation7 [shape = 'u8[32768]{0}', space=vmem, size = 0x8000, scoped, tag = 'output window, operand 0, single buffered']
    #allocation8 [shape = 'u8[32768]{0}', space=vmem, size = 0x8000, scoped, tag = 'output window, operand 1, single buffered']
    #allocation9 [shape = 's32[1]{0}', space=sflag, size = 0x4, scoped, tag = 'scoped memory for tpu_custom_call.1']
    %9 = vsyncpa [#allocation3], 0
    %10 = vsyncpa [#allocation6], 0
    %11 = vsyncpa [#allocation4], 0
    %12 = vsyncpa [#allocation9], 0
    // Predicated region
    $region2: #{tpu_custom_call.1} parent=1 // pred_check
      _
    $region3: #{tpu_custom_call.1} parent=1 // pred_check_branch
      %14 = sbr.rel (0) target = $region5
    $region4: #{tpu_custom_call.1} parent=1 // pred_region
      %s16 = ssub.s32 1024, 1024
      %17 = vsyncadd [#allocation3], %s16
      %s19 = sshll.u32 [#allocation2], 4
      %s20 = int_to_ptr.vmem [resolvable:$true] %s19
      %22 = dma.hbm_to_vmem [thread:$0]  %s0, 1024, %s20, [#allocation3]
    $region5: #{tpu_custom_call.1} parent=1 // pred_fallthru
      _
    // Predicated region
    $region6: #{tpu_custom_call.1} parent=1 // pred_check
      _
    $region7: #{tpu_custom_call.1} parent=1 // pred_check_branch
      %24 = sbr.rel (0) target = $region9
    $region8: #{tpu_custom_call.1} parent=1 // pred_region
      %s26 = ssub.s32 1024, 1024
      %27 = vsyncadd [#allocation6], %s26
      %s29 = sshll.u32 [#allocation5], 4
      %s30 = int_to_ptr.vmem [resolvable:$true] %s29
      %32 = dma.hbm_to_vmem [thread:$0]  %s1, 1024, %s30, [#allocation6]
    $region9: #{tpu_custom_call.1} parent=1 // pred_fallthru
      _
    // Predicated region
    $region10: #{tpu_custom_call.1} parent=1 // pred_check
      _
    $region11: #{tpu_custom_call.1} parent=1 // pred_check_branch
      %34 = sbr.rel (0) target = $region13
    $region12: #{tpu_custom_call.1} parent=1 // pred_region
      %35 = dma.done [#allocation3], 1024
    $region13: #{tpu_custom_call.1} parent=1 // pred_fallthru
      _
    // Predicated region
    $region14: #{tpu_custom_call.1} parent=1 // pred_check
      _
    $region15: #{tpu_custom_call.1} parent=1 // pred_check_branch
      %37 = sbr.rel (0) target = $region17
    $region16: #{tpu_custom_call.1} parent=1 // pred_region
      %38 = dma.done [#allocation6], 1024
    $region17: #{tpu_custom_call.1} parent=1 // pred_fallthru
      _
    %v39 = vld [vmem:[#allocation2] sm:$0xff]
    %v40 = vld [vmem:[#allocation2 + $0x8] sm:$0xff]
    %v41 = vld [vmem:[#allocation2 + $0x10] sm:$0xff]
    %v42 = vld [vmem:[#allocation2 + $0x18] sm:$0xff]
    %v43 = vld [vmem:[#allocation2 + $0x20] sm:$0xff]
    %v44 = vld [vmem:[#allocation2 + $0x28] sm:$0xff]
    %v45 = vld [vmem:[#allocation2 + $0x30] sm:$0xff]
    %v46 = vld [vmem:[#allocation2 + $0x38] sm:$0xff]
    %v47 = vld [vmem:[#allocation5] sm:$0xff]
    %v48 = vld [vmem:[#allocation5 + $0x8] sm:$0xff]
    %v49 = vld [vmem:[#allocation5 + $0x10] sm:$0xff]
    %v50 = vld [vmem:[#allocation5 + $0x18] sm:$0xff]
    %v51 = vld [vmem:[#allocation5 + $0x20] sm:$0xff]
    %v52 = vld [vmem:[#allocation5 + $0x28] sm:$0xff]
    %v53 = vld [vmem:[#allocation5 + $0x30] sm:$0xff]
    %v54 = vld [vmem:[#allocation5 + $0x38] sm:$0xff]
    %vm55 = vcmp.eq.f32.partialorder %v39, -1.0
    %vm56 = vcmp.eq.f32.partialorder %v40, -1.0
    %vm57 = vcmp.eq.f32.partialorder %v41, -1.0
    %vm58 = vcmp.eq.f32.partialorder %v42, -1.0
    %vm59 = vcmp.eq.f32.partialorder %v43, -1.0
    %vm60 = vcmp.eq.f32.partialorder %v44, -1.0
    %vm61 = vcmp.eq.f32.partialorder %v45, -1.0
    %vm62 = vcmp.eq.f32.partialorder %v46, -1.0
    %v63 = vsel %vm55, 0.0, %v39
    %v64 = vsel %vm56, 0.0, %v40
    %v65 = vsel %vm57, 0.0, %v41
    %v66 = vsel %vm58, 0.0, %v42
    %v67 = vsel %vm59, 0.0, %v43
    %v68 = vsel %vm60, 0.0, %v44
    %v69 = vsel %vm61, 0.0, %v45
    %v70 = vsel %vm62, 0.0, %v46
    %71 = vst [vmem:[#allocation7] sm:$0xff] %v63
    %72 = vst [vmem:[#allocation7 + $0x8] sm:$0xff] %v64
    %73 = vst [vmem:[#allocation7 + $0x10] sm:$0xff] %v65
    %74 = vst [vmem:[#allocation7 + $0x18] sm:$0xff] %v66
    %75 = vst [vmem:[#allocation7 + $0x20] sm:$0xff] %v67
    %76 = vst [vmem:[#allocation7 + $0x28] sm:$0xff] %v68
    %77 = vst [vmem:[#allocation7 + $0x30] sm:$0xff] %v69
    %78 = vst [vmem:[#allocation7 + $0x38] sm:$0xff] %v70
    %v79 = vsel %vm55, 0.0, %v47
    %v80 = vsel %vm56, 0.0, %v48
    %v81 = vsel %vm57, 0.0, %v49
    %v82 = vsel %vm58, 0.0, %v50
    %v83 = vsel %vm59, 0.0, %v51
    %v84 = vsel %vm60, 0.0, %v52
    %v85 = vsel %vm61, 0.0, %v53
    %v86 = vsel %vm62, 0.0, %v54
    %87 = vst [vmem:[#allocation8] sm:$0xff] %v79
    %88 = vst [vmem:[#allocation8 + $0x8] sm:$0xff] %v80
    %89 = vst [vmem:[#allocation8 + $0x10] sm:$0xff] %v81
    %90 = vst [vmem:[#allocation8 + $0x18] sm:$0xff] %v82
    %91 = vst [vmem:[#allocation8 + $0x20] sm:$0xff] %v83
    %92 = vst [vmem:[#allocation8 + $0x28] sm:$0xff] %v84
    %93 = vst [vmem:[#allocation8 + $0x30] sm:$0xff] %v85
    %94 = vst [vmem:[#allocation8 + $0x38] sm:$0xff] %v86
    // Predicated region
    $region18: #{tpu_custom_call.1} parent=1 // pred_check
      _
    $region19: #{tpu_custom_call.1} parent=1 // pred_check_branch
      %96 = sbr.rel (0) target = $region21
    $region20: #{tpu_custom_call.1} parent=1 // pred_region
      %s98 = ssub.s32 1024, 1024
      %99 = vsyncadd [#allocation4], %s98
      %s101 = sshll.u32 [#allocation7], 4
      %s102 = int_to_ptr.vmem [resolvable:$true] %s101
      %104 = dma.vmem_to_hbm [thread:$0]  %s102, 1024, %s2, [#allocation4]
    $region21: #{tpu_custom_call.1} parent=1 // pred_fallthru
      _
    // Predicated region
    $region22: #{tpu_custom_call.1} parent=1 // pred_check
      _
    $region23: #{tpu_custom_call.1} parent=1 // pred_check_branch
      %106 = sbr.rel (0) target = $region25
    $region24: #{tpu_custom_call.1} parent=1 // pred_region
      %s108 = ssub.s32 1024, 1024
      %109 = vsyncadd [#allocation9], %s108
      %s111 = sshll.u32 [#allocation8], 4
      %s112 = int_to_ptr.vmem [resolvable:$true] %s111
      %114 = dma.vmem_to_hbm [thread:$0]  %s112, 1024, %s3, [#allocation9]
    $region25: #{tpu_custom_call.1} parent=1 // pred_fallthru
      _
    // Predicated region
    $region26: #{tpu_custom_call.1} parent=1 // pred_check
      _
    $region27: #{tpu_custom_call.1} parent=1 // pred_check_branch
      %116 = sbr.rel (0) target = $region29
    $region28: #{tpu_custom_call.1} parent=1 // pred_region
      %117 = dma.done [#allocation4], 1024
    $region29: #{tpu_custom_call.1} parent=1 // pred_fallthru
      _
    // Predicated region
    $region30: #{tpu_custom_call.1} parent=1 // pred_check
      _
    $region31: #{tpu_custom_call.1} parent=1 // pred_check_branch
      %119 = sbr.rel (0) target = $region33
    $region32: #{tpu_custom_call.1} parent=1 // pred_region
      %120 = dma.done [#allocation9], 1024
    $region33: #{tpu_custom_call.1} parent=1 // pred_fallthru
      _
    %121 = vsyncpa [#allocation3], 1
    %122 = vsyncpa [#allocation6], 1
    %123 = vsyncpa [#allocation4], 1
    %124 = vsyncpa [#allocation9], 1

</llo_original>
